<compile_context>
chip_gen: v7x
topology: tpu7x:2x2x1
jax: 0.10.0
libtpu: 0.0.40
codegen_flags: <defaults>
</compile_context>

<pallas_src>
import functools

import jax
import jax.numpy as jnp
from jax.experimental import pallas as pl
from jax.experimental.pallas import tpu as pltpu


def _round_up(x, m):
    return ((x + m - 1) // m) * m


def _conv1d_block_kernel(x_ref, w_ref, p_ref, gsum_ref, gbc_ref, m_ref, o_ref,
                         *, k_taps):
    """One batch block per grid step.

    x_ref:    (Bb, C_row, T_in)   zero-padded input, row C_in == constant 1
    w_ref:    (C_out, K*C_row)    conv weight, tap-major cols, bias folded in
    p_ref:    (C_out, 2)          f32 [gamma, beta]
    gsum_ref: (G, C_out)          group-sum one-hot, entries 1/(cpg*T_out)
    gbc_ref:  (C_out, G)          group-broadcast one-hot, entries 1.0
    m_ref:    (Bb*T_pad, Bb)      block-diag 0/1 time mask (1 iff t < T_out)
    o_ref:    (Bb, C_out, T_pad)  output (columns >= T_out are unspecified)
    """
    Bb, C_out, T_pad = o_ref.shape

    # ---- in-kernel im2col (VMEM only; no K-fold HBM inflation) ------------
    # K lane-shifted copies of small 8-row-aligned slabs per batch element;
    # cheap relative to the K-fold HBM traffic they replace.
    parts = []
    for bb in range(Bb):                                   # small static loop
        taps = [x_ref[bb, :, k:k + T_pad] for k in range(k_taps)]
        parts.append(taps[0] if k_taps == 1 else jnp.concatenate(taps, axis=0))
    rhs = parts[0] if Bb == 1 else jnp.concatenate(parts, axis=1)
    # rhs: (K*C_row, Bb*T_pad)

    # ---- Conv1d (+ bias via the folded ones-row): ONE wide MXU matmul -----
    acc = jnp.dot(w_ref[...], rhs,
                  preferred_element_type=jnp.float32)      # (C_out, Bb*T_pad)

    # ---- GroupNorm stats: masked time-reduce on the otherwise-idle MXU ----
    # The block-diagonal mask keeps padded / garbage lanes out of the stats
    # without any full-slab select pass.
    msk = m_ref[...]
    s1 = jnp.dot(acc, msk, preferred_element_type=jnp.float32)        # (C_out, Bb)
    s2 = jnp.dot(acc * acc, msk, preferred_element_type=jnp.float32)  # (C_out, Bb)
    s12 = jnp.concatenate([s1, s2], axis=1)                           # (C_out, 2Bb)
    grp = jnp.dot(gbc_ref[...],
                  jnp.dot(gsum_ref[...], s12,
                          preferred_element_type=jnp.float32),
                  preferred_element_type=jnp.float32)                 # (C_out, 2Bb)
    mean = grp[:, :Bb]
    ex2 = grp[:, Bb:]
    # TODO(synk): single-pass E[x^2]-E[x]^2 can lose precision when
    # |mean| >> std; switch to a centered second pass if tighter GroupNorm
    # accuracy is ever required.
    var = jnp.maximum(ex2 - mean * mean, 0.0)              # cancellation guard
    inv = jax.lax.rsqrt(var + 1e-5)                        # GroupNorm eps
    gamma = p_ref[:, 0:1]
    beta = p_ref[:, 1:2]
    a = inv * gamma                                        # (C_out, Bb)
    c = beta - mean * a

    # ---- per-batch normalize + Mish on lane-aligned 128-multiple slices ---
    # The big matmul is hoisted above, so this static loop only carries small
    # per-iteration temporaries that die at their o_ref[bb] store.
    for bb in range(Bb):
        y = acc[:, bb * T_pad:(bb + 1) * T_pad] * a[:, bb:bb + 1] + c[:, bb:bb + 1]
        # Mish = y * tanh(softplus(y)); softplus computed in its stable form.
        # exp / log / tanh all run on the EUP slot, keeping VALU passes low.
        sp = jnp.maximum(y, 0.0) + jnp.log(1.0 + jnp.exp(-jnp.abs(y)))
        o_ref[bb] = (y * jnp.tanh(sp)).astype(o_ref.dtype)


@functools.partial(jax.jit, static_argnames=("n_groups", "mxu_dtype",
                                             "batch_block", "x_buffers"))
def conv1d_block(x, w, b, gamma, beta, *, n_groups, mxu_dtype=None,
                 batch_block=1, x_buffers=2):
    """Conv1d(padding=K//2) -> GroupNorm(n_groups) -> Mish.

    x: (B, C_in, T); w: (C_out, C_in, K); b/gamma/beta: (C_out,).

    Returns a (B, C_out, T_pad) array with T_pad = round_up(T_out, 128) and
    T_out = T + 2*(K//2) - K + 1; only the first T_out time columns are valid
    (padding returned instead of sliced to avoid an extra HBM round-trip).
    """
    B, C_in, T = x.shape
    C_out, _, K = w.shape
    assert C_out % n_groups == 0
    assert B % batch_block == 0
    if mxu_dtype is None:
        mxu_dtype = x.dtype

    pad = K // 2
    T_out = T + 2 * pad - K + 1              # PyTorch Conv1d output length
    T_pad = _round_up(T_out, 128)            # lane-dense output time axis
    T_in = T_pad + K - 1                     # input slab width (all taps fit)
    C_row = _round_up(C_in + 1, 8)           # +1 ones-row (bias), 8-row aligned
    KCx = K * C_row
    Bb = batch_block
    BbT = Bb * T_pad
    G = n_groups
    cpg = C_out // G

    # ---- wrapper glue: one fused pad + concat + cast pass over x ----------
    xp = jnp.pad(x, ((0, 0), (0, 0), (pad, T_in - T - pad)))
    parts = [xp, jnp.ones((B, 1, T_in), x.dtype)]
    if C_row - C_in - 1 > 0:
        parts.append(jnp.zeros((B, C_row - C_in - 1, T_in), x.dtype))
    x_slab = jnp.concatenate(parts, axis=1).astype(mxu_dtype)   # (B, C_row, T_in)

    # Conv weight, tap-major columns; conv bias folded into tap-0 ones column.
    w_t = jnp.transpose(w, (2, 0, 1))                            # (K, C_out, C_in)
    extra = jnp.zeros((K, C_out, C_row - C_in), w.dtype).at[0, :, 0].set(b)
    w2 = jnp.transpose(jnp.concatenate([w_t, extra], axis=2),
                       (1, 0, 2)).reshape(C_out, KCx).astype(mxu_dtype)

    p = jnp.stack([gamma, beta], axis=1).astype(jnp.float32)     # (C_out, 2)

    gid = jnp.arange(C_out) // cpg
    onehot = (jnp.arange(G)[:, None] == gid[None, :])
    gsum = onehot.astype(jnp.float32) / float(cpg * T_out)       # (G, C_out)
    gbc = onehot.T.astype(jnp.float32)                           # (C_out, G)

    rows = jnp.arange(BbT)
    msk = ((rows[:, None] // T_pad == jnp.arange(Bb)[None, :])
           & ((rows[:, None] % T_pad) < T_out)).astype(jnp.float32)  # (BbT, Bb)

    # ---- VMEM budget: buffered blocks + constants + f32 temps + headroom.
    # Capped at 48 MiB so the plan also fits v7x's 64 MiB physical VMEM; on
    # v5e/v6e (128 MiB) raise the cap to support larger batch blocks.
    ms = jnp.dtype(mxu_dtype).itemsize
    osz = jnp.dtype(x.dtype).itemsize
    in_blk = Bb * C_row * _round_up(T_in, 128) * ms
    out_blk = Bb * C_out * T_pad * osz
    consts = C_out * KCx * ms + (BbT * Bb + 2 * G * C_out + 2 * C_out) * 4
    temps = KCx * BbT * ms + 5 * C_out * BbT * 4
    vmem_limit = int(min(48 << 20,
                         max(16 << 20,
                             x_buffers * in_blk + 2 * out_blk + consts
                             + temps + (4 << 20))))

    if x_buffers == 2:
        x_spec = pl.BlockSpec((Bb, C_row, T_in), lambda i: (i, 0, 0))
    else:   # deeper input buffering if the input DMA ever becomes exposed
        x_spec = pl.BlockSpec((Bb, C_row, T_in), lambda i: (i, 0, 0),
                              pipeline_mode=pl.Buffered(x_buffers))

    kernel = functools.partial(_conv1d_block_kernel, k_taps=K)
    return pl.pallas_call(
        kernel,
        out_shape=jax.ShapeDtypeStruct((B, C_out, T_pad), x.dtype),
        grid=(B // Bb,),
        in_specs=[
            x_spec,
            pl.BlockSpec((C_out, KCx), lambda i: (0, 0)),
            pl.BlockSpec((C_out, 2), lambda i: (0, 0)),
            pl.BlockSpec((G, C_out), lambda i: (0, 0)),
            pl.BlockSpec((C_out, G), lambda i: (0, 0)),
            pl.BlockSpec((BbT, Bb), lambda i: (0, 0)),
        ],
        out_specs=pl.BlockSpec((Bb, C_out, T_pad), lambda i: (i, 0, 0)),
        compiler_params=pltpu.CompilerParams(
            dimension_semantics=("parallel",),
            vmem_limit_bytes=vmem_limit),
    )(x_slab, w2, p, gsum, gbc, msk)


def _reference(x, w, b, gamma, beta, n_groups):
    """Pure-JAX reference matching PyTorch Conv1d -> GroupNorm -> Mish."""
    K = w.shape[2]
    pad = K // 2
    y = jax.lax.conv_general_dilated(
        x, w, window_strides=(1,), padding=[(pad, pad)],
        dimension_numbers=("NCH", "OIH", "NCH"))
    y = y + b[None, :, None]
    B, C, T = y.shape
    yg = y.reshape(B, n_groups, (C // n_groups) * T)
    mean = yg.mean(axis=-1, keepdims=True)
    var = ((yg - mean) ** 2).mean(axis=-1, keepdims=True)
    yn = ((yg - mean) / jnp.sqrt(var + 1e-5)).reshape(B, C, T)
    yn = yn * gamma[None, :, None] + beta[None, :, None]
    return yn * jnp.tanh(jax.nn.softplus(yn))


if __name__ == "__main__":
    B, C_in, C_out, T, K, n_groups = 4, 4, 16, 16, 3, 8

    key = jax.random.PRNGKey(0)
    kx, kw, kb, kg, kbe = jax.random.split(key, 5)
    x = jax.random.normal(kx, (B, C_in, T), dtype=jnp.float32)
    # Deterministic synthetic parameters (shapes per nn.Conv1d / nn.GroupNorm).
    w = jax.random.normal(kw, (C_out, C_in, K), dtype=jnp.float32) * 0.2
    b = jax.random.normal(kb, (C_out,), dtype=jnp.float32) * 0.1
    gamma = 1.0 + 0.1 * jax.random.normal(kg, (C_out,), dtype=jnp.float32)
    beta = 0.1 * jax.random.normal(kbe, (C_out,), dtype=jnp.float32)

    ref = _reference(x, w, b, gamma, beta, n_groups)
    T_out = T  # odd K with padding K//2 preserves length

    # f32 MXU path, batch_block=1 -> 4 grid steps: tight correctness check.
    out_f32 = conv1d_block(x, w, b, gamma, beta, n_groups=n_groups,
                           mxu_dtype=jnp.float32, batch_block=1)
    out_f32 = jax.block_until_ready(out_f32)
    assert out_f32.shape[0] == B and out_f32.shape[1] == C_out
    assert out_f32.shape[2] >= T_out
    err = float(jnp.max(jnp.abs(out_f32[:, :, :T_out] - ref)))
    assert jnp.allclose(out_f32[:, :, :T_out], ref, atol=2e-4, rtol=2e-4), err

    # bf16 MXU path, batch_block=2 -> 2 grid steps (looser tolerance).
    out_bf16 = conv1d_block(x, w, b, gamma, beta, n_groups=n_groups,
                            mxu_dtype=jnp.bfloat16, batch_block=2)
    out_bf16 = jax.block_until_ready(out_bf16)
    err_bf = float(jnp.max(jnp.abs(out_bf16[:, :, :T_out] - ref)))
    assert jnp.allclose(out_bf16[:, :, :T_out], ref, atol=5e-2, rtol=5e-2), err_bf

    print("KERNEL_OK")
</pallas_src>

<mosaic_0001>
module attributes {stable_mosaic.version = 11 : i64} {
  func.func @_conv1d_block_kernel(%arg0: i32, %arg1: memref<1x8x130xf32, #tpu.memory_space<vmem>>, %arg2: memref<16x24xf32, #tpu.memory_space<vmem>>, %arg3: memref<16x2xf32, #tpu.memory_space<vmem>>, %arg4: memref<8x16xf32, #tpu.memory_space<vmem>>, %arg5: memref<16x8xf32, #tpu.memory_space<vmem>>, %arg6: memref<128x1xf32, #tpu.memory_space<vmem>>, %arg7: memref<1x16x128xf32, #tpu.memory_space<vmem>>) attributes {dimension_semantics = [#tpu.dimension_semantics<parallel>], iteration_bounds = array<i64: 4>, scalar_prefetch = 0 : i64, scratch_operands = 0 : i64, tpu.core_type = #tpu.core_type<tc>, window_params = [{transform_indices = @transform_0, window_bounds = array<i64: 1, 8, 130>}, {pipeline_mode = #tpu.pipeline_mode<synchronous>, transform_indices = @transform_1, window_bounds = array<i64: 16, 24>}, {pipeline_mode = #tpu.pipeline_mode<synchronous>, transform_indices = @transform_2, window_bounds = array<i64: 16, 2>}, {pipeline_mode = #tpu.pipeline_mode<synchronous>, transform_indices = @transform_3, window_bounds = array<i64: 8, 16>}, {pipeline_mode = #tpu.pipeline_mode<synchronous>, transform_indices = @transform_4, window_bounds = array<i64: 16, 8>}, {pipeline_mode = #tpu.pipeline_mode<synchronous>, transform_indices = @transform_5, window_bounds = array<i64: 128, 1>}, {transform_indices = @transform_6, window_bounds = array<i64: 1, 16, 128>}]} {
    %c0 = arith.constant 0 : index
    %c0_0 = arith.constant 0 : index
    %c0_1 = arith.constant 0 : index
    %0 = vector.load %arg1[%c0, %c0_0, %c0_1] : memref<1x8x130xf32, #tpu.memory_space<vmem>>, vector<1x8x128xf32>
    %1 = vector.shape_cast %0 : vector<1x8x128xf32> to vector<8x128xf32>
    %c0_2 = arith.constant 0 : index
    %c0_3 = arith.constant 0 : index
    %c1 = arith.constant 1 : index
    %2 = vector.load %arg1[%c0_2, %c0_3, %c1] : memref<1x8x130xf32, #tpu.memory_space<vmem>>, vector<1x8x128xf32>
    %3 = vector.shape_cast %2 : vector<1x8x128xf32> to vector<8x128xf32>
    %c0_4 = arith.constant 0 : index
    %c0_5 = arith.constant 0 : index
    %c2 = arith.constant 2 : index
    %4 = vector.load %arg1[%c0_4, %c0_5, %c2] : memref<1x8x130xf32, #tpu.memory_space<vmem>>, vector<1x8x128xf32>
    %5 = vector.shape_cast %4 : vector<1x8x128xf32> to vector<8x128xf32>
    %6 = tpu.concatenate %1, %3, %5 in 0 : vector<8x128xf32>, vector<8x128xf32>, vector<8x128xf32> -> vector<24x128xf32>
    %c0_6 = arith.constant 0 : index
    %c0_7 = arith.constant 0 : index
    %7 = vector.load %arg2[%c0_6, %c0_7] : memref<16x24xf32, #tpu.memory_space<vmem>>, vector<16x24xf32>
    %cst = arith.constant dense<0.000000e+00> : vector<16x128xf32>
    %8 = tpu.matmul %7, %6, %cst {dimension_numbers = #tpu.dot_dimension_numbers<[1], [0], [0], [1], [0, 0, 1, 1], [], []>} : vector<16x24xf32>, vector<24x128xf32>, vector<16x128xf32> -> vector<16x128xf32>
    %c0_8 = arith.constant 0 : index
    %c0_9 = arith.constant 0 : index
    %9 = vector.load %arg6[%c0_8, %c0_9] : memref<128x1xf32, #tpu.memory_space<vmem>>, vector<128x1xf32>
    %cst_10 = arith.constant dense<0.000000e+00> : vector<16x1xf32>
    %10 = tpu.matmul %8, %9, %cst_10 {dimension_numbers = #tpu.dot_dimension_numbers<[1], [0], [0], [1], [0, 0, 1, 1], [], []>} : vector<16x128xf32>, vector<128x1xf32>, vector<16x1xf32> -> vector<16x1xf32>
    %11 = arith.mulf %8, %8 : vector<16x128xf32>
    %cst_11 = arith.constant dense<0.000000e+00> : vector<16x1xf32>
    %12 = tpu.matmul %11, %9, %cst_11 {dimension_numbers = #tpu.dot_dimension_numbers<[1], [0], [0], [1], [0, 0, 1, 1], [], []>} : vector<16x128xf32>, vector<128x1xf32>, vector<16x1xf32> -> vector<16x1xf32>
    %13 = tpu.concatenate %10, %12 in 1 : vector<16x1xf32>, vector<16x1xf32> -> vector<16x2xf32>
    %c0_12 = arith.constant 0 : index
    %c0_13 = arith.constant 0 : index
    %14 = vector.load %arg5[%c0_12, %c0_13] : memref<16x8xf32, #tpu.memory_space<vmem>>, vector<16x8xf32>
    %c0_14 = arith.constant 0 : index
    %c0_15 = arith.constant 0 : index
    %15 = vector.load %arg4[%c0_14, %c0_15] : memref<8x16xf32, #tpu.memory_space<vmem>>, vector<8x16xf32>
    %cst_16 = arith.constant dense<0.000000e+00> : vector<8x2xf32>
    %16 = tpu.matmul %15, %13, %cst_16 {dimension_numbers = #tpu.dot_dimension_numbers<[1], [0], [0], [1], [0, 0, 1, 1], [], []>} : vector<8x16xf32>, vector<16x2xf32>, vector<8x2xf32> -> vector<8x2xf32>
    %cst_17 = arith.constant dense<0.000000e+00> : vector<16x2xf32>
    %17 = tpu.matmul %14, %16, %cst_17 {dimension_numbers = #tpu.dot_dimension_numbers<[1], [0], [0], [1], [0, 0, 1, 1], [], []>} : vector<16x8xf32>, vector<8x2xf32>, vector<16x2xf32> -> vector<16x2xf32>
    %18 = vector.extract_strided_slice %17 {offsets = [0, 0], sizes = [16, 1], strides = [1, 1]} : vector<16x2xf32> to vector<16x1xf32>
    %19 = vector.extract_strided_slice %17 {offsets = [0, 1], sizes = [16, 1], strides = [1, 1]} : vector<16x2xf32> to vector<16x1xf32>
    %20 = arith.mulf %18, %18 : vector<16x1xf32>
    %21 = arith.subf %19, %20 : vector<16x1xf32>
    %cst_18 = arith.constant 0.000000e+00 : f32
    %22 = vector.broadcast %cst_18 : f32 to vector<16x1xf32>
    %23 = arith.maximumf %21, %22 : vector<16x1xf32>
    %cst_19 = arith.constant 9.99999974E-6 : f32
    %24 = vector.broadcast %cst_19 : f32 to vector<16x1xf32>
    %25 = arith.addf %23, %24 : vector<16x1xf32>
    %26 = math.rsqrt %25 : vector<16x1xf32>
    %c0_20 = arith.constant 0 : index
    %c0_21 = arith.constant 0 : index
    %27 = vector.load %arg3[%c0_20, %c0_21] : memref<16x2xf32, #tpu.memory_space<vmem>>, vector<16x1xf32>
    %c0_22 = arith.constant 0 : index
    %c1_23 = arith.constant 1 : index
    %28 = vector.load %arg3[%c0_22, %c1_23] : memref<16x2xf32, #tpu.memory_space<vmem>>, vector<16x1xf32>
    %29 = arith.mulf %26, %27 : vector<16x1xf32>
    %30 = arith.mulf %18, %29 : vector<16x1xf32>
    %31 = arith.subf %28, %30 : vector<16x1xf32>
    %32 = vector.broadcast %29 : vector<16x1xf32> to vector<16x128xf32>
    %33 = arith.mulf %8, %32 : vector<16x128xf32>
    %34 = vector.broadcast %31 : vector<16x1xf32> to vector<16x128xf32>
    %35 = arith.addf %33, %34 : vector<16x128xf32>
    %cst_24 = arith.constant 0.000000e+00 : f32
    %36 = vector.broadcast %cst_24 : f32 to vector<16x128xf32>
    %37 = arith.maximumf %35, %36 : vector<16x128xf32>
    %38 = math.absf %35 : vector<16x128xf32>
    %cst_25 = arith.constant 0.000000e+00 : f32
    %39 = vector.broadcast %cst_25 : f32 to vector<16x128xf32>
    %40 = arith.subf %39, %38 : vector<16x128xf32>
    %41 = math.exp %40 : vector<16x128xf32>
    %cst_26 = arith.constant 1.000000e+00 : f32
    %42 = vector.broadcast %cst_26 : f32 to vector<16x128xf32>
    %43 = arith.addf %42, %41 : vector<16x128xf32>
    %44 = math.log %43 : vector<16x128xf32>
    %45 = arith.addf %37, %44 : vector<16x128xf32>
    %46 = math.tanh %45 : vector<16x128xf32>
    %47 = arith.mulf %35, %46 : vector<16x128xf32>
    %c0_27 = arith.constant 0 : index
    %c0_28 = arith.constant 0 : index
    %c0_29 = arith.constant 0 : index
    %48 = vector.load %arg7[%c0_27, %c0_28, %c0_29] : memref<1x16x128xf32, #tpu.memory_space<vmem>>, vector<1x16x128xf32>
    %49 = vector.shape_cast %48 : vector<1x16x128xf32> to vector<16x128xf32>
    %50 = vector.shape_cast %47 : vector<16x128xf32> to vector<1x16x128xf32>
    tpu.vector_store %arg7[%c0_27, %c0_28, %c0_29], %50 {strides = array<i32>} : memref<1x16x128xf32, #tpu.memory_space<vmem>>, vector<1x16x128xf32>,
    return
  }
  func.func @transform_0(%arg0: i32) -> (i32, i32, i32) {
    %c0_i32 = arith.constant 0 : i32
    %c0_i32_0 = arith.constant 0 : i32
    %c0_i32_1 = arith.constant 0 : i32
    return %arg0, %c0_i32, %c0_i32_0 : i32, i32, i32
  }
  func.func @transform_1(%arg0: i32) -> (i32, i32) {
    %c0_i32 = arith.constant 0 : i32
    %c0_i32_0 = arith.constant 0 : i32
    %c0_i32_1 = arith.constant 0 : i32
    return %c0_i32, %c0_i32_0 : i32, i32
  }
  func.func @transform_2(%arg0: i32) -> (i32, i32) {
    %c0_i32 = arith.constant 0 : i32
    %c0_i32_0 = arith.constant 0 : i32
    %c0_i32_1 = arith.constant 0 : i32
    return %c0_i32, %c0_i32_0 : i32, i32
  }
  func.func @transform_3(%arg0: i32) -> (i32, i32) {
    %c0_i32 = arith.constant 0 : i32
    %c0_i32_0 = arith.constant 0 : i32
    %c0_i32_1 = arith.constant 0 : i32
    return %c0_i32, %c0_i32_0 : i32, i32
  }
  func.func @transform_4(%arg0: i32) -> (i32, i32) {
    %c0_i32 = arith.constant 0 : i32
    %c0_i32_0 = arith.constant 0 : i32
    %c0_i32_1 = arith.constant 0 : i32
    return %c0_i32, %c0_i32_0 : i32, i32
  }
  func.func @transform_5(%arg0: i32) -> (i32, i32) {
    %c0_i32 = arith.constant 0 : i32
    %c0_i32_0 = arith.constant 0 : i32
    %c0_i32_1 = arith.constant 0 : i32
    return %c0_i32, %c0_i32_0 : i32, i32
  }
  func.func @transform_6(%arg0: i32) -> (i32, i32, i32) {
    %c0_i32 = arith.constant 0 : i32
    %c0_i32_0 = arith.constant 0 : i32
    %c0_i32_1 = arith.constant 0 : i32
    return %arg0, %c0_i32, %c0_i32_0 : i32, i32, i32
  }
}

</mosaic_0001>

<llo_original>
// kernel: conv1d_block.1
$region0: #{conv1d_block.1}
  #allocation0 [shape = 'u32[]', space=smem, size = 0x4, offset = 0x4, fixed_abs, tag = 'smem constant byte address 0x4 - core index']
  #allocation1 [shape = 'u32[144,128]{1,0:T(1,128)}', space=vmem, size = 0x12000, scoped, tag = 'internal scratch']
  %s0 = inlined_call_operand.vmem [shape: f32[4,8,130], index: 0, kind: input, shape index: {}]
  %s1 = inlined_call_operand.vmem [shape: f32[16,24], index: 1, kind: input, shape index: {}]
  %s2 = inlined_call_operand.vmem [shape: f32[16,2], index: 2, kind: input, shape index: {}]
  %s3 = inlined_call_operand.vmem [shape: f32[8,16], index: 3, kind: input, shape index: {}]
  %s4 = inlined_call_operand.vmem [shape: f32[16,8], index: 4, kind: input, shape index: {}]
  %s5 = inlined_call_operand.vmem [shape: f32[128,1], index: 5, kind: input, shape index: {}]
  %s6 = inlined_call_operand.hbm [shape: f32[4,16,128], index: 6, kind: output, shape index: {}]
  %s7 = sld [smem:[#allocation0]]
  $region57: #{conv1d_block.1} parent=0
    _
  %s9 = ssub.s32 1, %s7
  %s10 = scalar_select 0, %s9, %s7
  $region1: #{conv1d_block.1} parent=0
    #allocation2 [shape = 'u8[16384]{0}', space=vmem, size = 0x4000, scoped, tag = 'output window, operand 0']
    #allocation3 [shape = 's32[2]{0}', space=sflag, size = 0x8, scoped, tag = 'scoped memory for conv1d_block.1']
    %11 = vsyncpa [#allocation3], 0
    %s12 = scalar_lea.sflag [#allocation3], 1
    %13 = vsyncpa %s12, 0
    loop: start=0, step=1, limit=6
    $region2: #{conv1d_block.1} parent=1 // loop_pre_header
      _
    $region3: #{conv1d_block.1} parent=1 // loop_header
      %s15 = sphi 0, %s19
      %p16 = scmp.ge.s32.totalorder %s15, 6
      %s25 = sphi 0, %s27
      %s28 = sphi 0, %s25
      %s29 = sphi 0, %s28
      %s45 = sphi 0, %s29
      %s49 = sphi 0, %s49
      %s51 = sphi 0, %s49
      %s52 = sphi 0, %s51
      %s66 = sphi 0, %s52
      %s70 = sphi 0, %s70
      %s72 = sphi 0, %s70
      %s73 = sphi 0, %s72
      %s87 = sphi 0, %s73
      %s91 = sphi 0, %s91
      %s93 = sphi 0, %s91
      %s94 = sphi 0, %s93
      %s108 = sphi 0, %s94
      %s112 = sphi 0, %s112
      %s114 = sphi 0, %s112
      %s115 = sphi 0, %s114
      %s129 = sphi 0, %s115
      %s133 = sphi 0, %s133
      %s135 = sphi 0, %s133
      %s136 = sphi 0, %s135
      %s150 = sphi 0, %s136
      %s156 = sphi 0, %s158
      %s159 = sphi 0, %s156
      %s160 = sphi 0, %s159
      %s176 = sphi 0, %s160
    $region4: #{conv1d_block.1} parent=1 // loop_header_branch
      %18 = sbr.rel (%p16) target = $region8
    $region5: #{conv1d_block.1} parent=1 // loop_body
      %s20 = ssub.s32 %s15, 1
      %s21 = ssub.s32 %s15, 2
      %s22 = sadd.s32 %s15, 1
      %s23 = ssub.s32 %s15, %s22
      %p24 = scmp.eq.s32.totalorder %s23, 0
      %s26 = sadd.s32 %s25, 1
      %s27 = scalar_select %p24, %s25, %s26
      %p30 = pneg %p24
      %p31 = scmp.eq.s32.totalorder %s15, 3
      %p32 = por %p30, %p31
      %p33 = scmp.ne.s32.totalorder %s25, %s28
      %p34 = scmp.eq.s32.totalorder %s15, 0
      %p35 = por %p33, %p34
      %p36 = scmp.ne.s32.totalorder %s25, %s28
      %p37 = scmp.eq.s32.totalorder %s20, 3
      %p38 = por %p36, %p37
      %p39 = scmp.ne.s32.totalorder %s28, %s29
      %p40 = scmp.eq.s32.totalorder %s20, 0
      %p41 = por %p39, %p40
      %p42 = scmp.ne.s32.totalorder %s28, %s29
      %p43 = scmp.eq.s32.totalorder %s21, 3
      %p44 = por %p42, %p43
      %p46 = scmp.ne.s32.totalorder %s29, %s45
      %p47 = scmp.eq.s32.totalorder %s21, 0
      %p48 = por %p46, %p47
      %s50 = sadd.s32 %s49, 1
      %p53 = scmp.eq.s32.totalorder %s15, 3
      %p54 = scmp.ne.s32.totalorder %s49, %s51
      %p55 = scmp.eq.s32.totalorder %s15, 0
      %p56 = por %p54, %p55
      %p57 = scmp.ne.s32.totalorder %s49, %s51
      %p58 = scmp.eq.s32.totalorder %s20, 3
      %p59 = por %p57, %p58
      %p60 = scmp.ne.s32.totalorder %s51, %s52
      %p61 = scmp.eq.s32.totalorder %s20, 0
      %p62 = por %p60, %p61
      %p63 = scmp.ne.s32.totalorder %s51, %s52
      %p64 = scmp.eq.s32.totalorder %s21, 3
      %p65 = por %p63, %p64
      %p67 = scmp.ne.s32.totalorder %s52, %s66
      %p68 = scmp.eq.s32.totalorder %s21, 0
      %p69 = por %p67, %p68
      %s71 = sadd.s32 %s70, 1
      %p74 = scmp.eq.s32.totalorder %s15, 3
      %p75 = scmp.ne.s32.totalorder %s70, %s72
      %p76 = scmp.eq.s32.totalorder %s15, 0
      %p77 = por %p75, %p76
      %p78 = scmp.ne.s32.totalorder %s70, %s72
      %p79 = scmp.eq.s32.totalorder %s20, 3
      %p80 = por %p78, %p79
      %p81 = scmp.ne.s32.totalorder %s72, %s73
      %p82 = scmp.eq.s32.totalorder %s20, 0
      %p83 = por %p81, %p82
      %p84 = scmp.ne.s32.totalorder %s72, %s73
      %p85 = scmp.eq.s32.totalorder %s21, 3
      %p86 = por %p84, %p85
      %p88 = scmp.ne.s32.totalorder %s73, %s87
      %p89 = scmp.eq.s32.totalorder %s21, 0
      %p90 = por %p88, %p89
      %s92 = sadd.s32 %s91, 1
      %p95 = scmp.eq.s32.totalorder %s15, 3
      %p96 = scmp.ne.s32.totalorder %s91, %s93
      %p97 = scmp.eq.s32.totalorder %s15, 0
      %p98 = por %p96, %p97
      %p99 = scmp.ne.s32.totalorder %s91, %s93
      %p100 = scmp.eq.s32.totalorder %s20, 3
      %p101 = por %p99, %p100
      %p102 = scmp.ne.s32.totalorder %s93, %s94
      %p103 = scmp.eq.s32.totalorder %s20, 0
      %p104 = por %p102, %p103
      %p105 = scmp.ne.s32.totalorder %s93, %s94
      %p106 = scmp.eq.s32.totalorder %s21, 3
      %p107 = por %p105, %p106
      %p109 = scmp.ne.s32.totalorder %s94, %s108
      %p110 = scmp.eq.s32.totalorder %s21, 0
      %p111 = por %p109, %p110
      %s113 = sadd.s32 %s112, 1
      %p116 = scmp.eq.s32.totalorder %s15, 3
      %p117 = scmp.ne.s32.totalorder %s112, %s114
      %p118 = scmp.eq.s32.totalorder %s15, 0
      %p119 = por %p117, %p118
      %p120 = scmp.ne.s32.totalorder %s112, %s114
      %p121 = scmp.eq.s32.totalorder %s20, 3
      %p122 = por %p120, %p121
      %p123 = scmp.ne.s32.totalorder %s114, %s115
      %p124 = scmp.eq.s32.totalorder %s20, 0
      %p125 = por %p123, %p124
      %p126 = scmp.ne.s32.totalorder %s114, %s115
      %p127 = scmp.eq.s32.totalorder %s21, 3
      %p128 = por %p126, %p127
      %p130 = scmp.ne.s32.totalorder %s115, %s129
      %p131 = scmp.eq.s32.totalorder %s21, 0
      %p132 = por %p130, %p131
      %s134 = sadd.s32 %s133, 1
      %p137 = scmp.eq.s32.totalorder %s15, 3
      %p138 = scmp.ne.s32.totalorder %s133, %s135
      %p139 = scmp.eq.s32.totalorder %s15, 0
      %p140 = por %p138, %p139
      %p141 = scmp.ne.s32.totalorder %s133, %s135
      %p142 = scmp.eq.s32.totalorder %s20, 3
      %p143 = por %p141, %p142
      %p144 = scmp.ne.s32.totalorder %s135, %s136
      %p145 = scmp.eq.s32.totalorder %s20, 0
      %p146 = por %p144, %p145
      %p147 = scmp.ne.s32.totalorder %s135, %s136
      %p148 = scmp.eq.s32.totalorder %s21, 3
      %p149 = por %p147, %p148
      %p151 = scmp.ne.s32.totalorder %s136, %s150
      %p152 = scmp.eq.s32.totalorder %s21, 0
      %p153 = por %p151, %p152
      %s154 = ssub.s32 %s15, %s22
      %p155 = scmp.eq.s32.totalorder %s154, 0
      %s157 = sadd.s32 %s156, 1
      %s158 = scalar_select %p155, %s156, %s157
      %p161 = pneg %p155
      %p162 = scmp.eq.s32.totalorder %s15, 3
      %p163 = por %p161, %p162
      %p164 = scmp.ne.s32.totalorder %s156, %s159
      %p165 = scmp.eq.s32.totalorder %s15, 0
      %p166 = por %p164, %p165
      %p167 = scmp.ne.s32.totalorder %s156, %s159
      %p168 = scmp.eq.s32.totalorder %s20, 3
      %p169 = por %p167, %p168
      %p170 = scmp.ne.s32.totalorder %s159, %s160
      %p171 = scmp.eq.s32.totalorder %s20, 0
      %p172 = por %p170, %p171
      %p173 = scmp.ne.s32.totalorder %s159, %s160
      %p174 = scmp.eq.s32.totalorder %s21, 3
      %p175 = por %p173, %p174
      %p177 = scmp.ne.s32.totalorder %s160, %s176
      %p178 = scmp.eq.s32.totalorder %s21, 0
      %p179 = por %p177, %p178
      %p180 = scmp.le.s32.totalorder 1, %s15
      %p181 = scmp.lt.s32.totalorder %s15, 5
      %p182 = pnand %p180, %p181
      %p183 = pneg %p182
      // Predicated region
      $region9: #{conv1d_block.1} parent=5 // pred_check
        _
      $region10: #{conv1d_block.1} parent=5 // pred_check_branch
        %185 = sbr.rel (%p182) target = $region12
      $region11: #{conv1d_block.1} parent=5 // pred_region
        %s186 = ssub.s32 %s15, 1
        // Predicated region
        $region13: #{conv1d_block.1} parent=11 // pred_check
          %p187 = pneg %p62
        $region14: #{conv1d_block.1} parent=11 // pred_check_branch
          %189 = sbr.rel (%p187) target = $region16
        $region15: #{conv1d_block.1} parent=11 // pred_region
          _
        $region16: #{conv1d_block.1} parent=11 // pred_fallthru
          _
        // Predicated region
        $region17: #{conv1d_block.1} parent=11 // pred_check
          %p190 = pneg %p83
        $region18: #{conv1d_block.1} parent=11 // pred_check_branch
          %192 = sbr.rel (%p190) target = $region20
        $region19: #{conv1d_block.1} parent=11 // pred_region
          _
        $region20: #{conv1d_block.1} parent=11 // pred_fallthru
          _
        // Predicated region
        $region21: #{conv1d_block.1} parent=11 // pred_check
          %p193 = pneg %p104
        $region22: #{conv1d_block.1} parent=11 // pred_check_branch
          %195 = sbr.rel (%p193) target = $region24
        $region23: #{conv1d_block.1} parent=11 // pred_region
          _
        $region24: #{conv1d_block.1} parent=11 // pred_fallthru
          _
        // Predicated region
        $region25: #{conv1d_block.1} parent=11 // pred_check
          %p196 = pneg %p125
        $region26: #{conv1d_block.1} parent=11 // pred_check_branch
          %198 = sbr.rel (%p196) target = $region28
        $region27: #{conv1d_block.1} parent=11 // pred_region
          _
        $region28: #{conv1d_block.1} parent=11 // pred_fallthru
          _
        // Predicated region
        $region29: #{conv1d_block.1} parent=11 // pred_check
          %p199 = pneg %p146
        $region30: #{conv1d_block.1} parent=11 // pred_check_branch
          %201 = sbr.rel (%p199) target = $region32
        $region31: #{conv1d_block.1} parent=11 // pred_region
          _
        $region32: #{conv1d_block.1} parent=11 // pred_fallthru
          _
      $region12: #{conv1d_block.1} parent=5 // pred_fallthru
        _
      %p202 = scmp.lt.s32.totalorder %s15, 4
      // Predicated region
      $region33: #{conv1d_block.1} parent=5 // pred_check
        %p203 = pneg %p202
      $region34: #{conv1d_block.1} parent=5 // pred_check_branch
        %205 = sbr.rel (%p203) target = $region36
      $region35: #{conv1d_block.1} parent=5 // pred_region
        // Predicated region
        $region37: #{conv1d_block.1} parent=35 // pred_check
          %p206 = pneg %p35
        $region38: #{conv1d_block.1} parent=35 // pred_check_branch
          %208 = sbr.rel (%p206) target = $region40
        $region39: #{conv1d_block.1} parent=35 // pred_region
          %p209 = scmp.lt.s32.totalorder %s15, 3
          %s210 = scalar_select %p209, %s15, 3
          %s211 = smul.addr %s210, 2
          %s212 = smul.addr %s211, 8
          %s213 = scalar_lea.vmem %s0, %s212
        $region40: #{conv1d_block.1} parent=35 // pred_fallthru
          _
      $region36: #{conv1d_block.1} parent=5 // pred_fallthru
        _
      %p214 = scmp.le.s32.totalorder 1, %s15
      %p215 = scmp.lt.s32.totalorder %s15, 5
      %p216 = pnand %p214, %p215
      %p217 = pneg %p216
      // Predicated region
      $region41: #{conv1d_block.1} parent=5 // pred_check
        _
      $region42: #{conv1d_block.1} parent=5 // pred_check_branch
        %219 = sbr.rel (%p216) target = $region44
      $region43: #{conv1d_block.1} parent=5 // pred_region
        %s220 = ssub.s32 %s15, 1
        %p221 = scmp.lt.s32.totalorder %s20, 3
        %s222 = scalar_select %p221, %s20, 3
        %s223 = smul.addr %s222, 2
        %s224 = smul.addr %s223, 8
        %s225 = scalar_lea.vmem %s0, %s224
        %p226 = pneg %p41
        %p227 = pneg %p38
        %p228 = pneg %p62
        %p229 = pneg %p59
        %p230 = pneg %p83
        %p231 = pneg %p80
        %p232 = pneg %p104
        %p233 = pneg %p101
        %p234 = pneg %p125
        %p235 = pneg %p122
        %p236 = pneg %p146
        %p237 = pneg %p143
        %p238 = pneg %p172
        %p239 = pneg %p169
        %s240 = sand.u32 %s159, 1
        %s241 = scalar_lea.sflag [#allocation3], %s240
        %s242 = sand.u32 %s159, 1
        %s243 = smul.addr %s242, 16
        %s244 = scalar_lea.vmem [#allocation2], %s243
        %p245 = scmp.lt.s32.totalorder %s20, 3
        %s246 = scalar_select %p245, %s20, 3
        %s247 = smul.addr %s246, 2
        %s248 = smul.addr %s247, 8
        %s249 = scalar_lea.vmem %s0, %s248
        %v250 = vld [vmem:[%s249] sm:$0xff]
        %v251 = vld [vmem:[%s249 + $0x8] sm:$0xff]
        %254 = vrot.lane.b32.xlu0 %v250, 127
        %v255 = vpop.permute.xlu0 %254
        %256 = vrot.lane.b32.xlu0 %v251, 127
        %v257 = vpop.permute.xlu0 %256
        %vm258 = vcmask 1039360
        %v259 = vsel %vm258, %v255, %v257
        %261 = vrot.lane.b32.xlu0 %v250, 126
        %v262 = vpop.permute.xlu0 %261
        %263 = vrot.lane.b32.xlu0 %v251, 126
        %v264 = vpop.permute.xlu0 %263
        %vm265 = vcmask 1031168
        %v266 = vsel %vm265, %v262, %v264
        %v268 = vld [vmem:[%s1] sm:$0xff]
        %v269 = vld [vmem:[%s1 + $0x8] sm:$0xff]
        %vm270 = vcmask 195584
        %v272 = vsel %vm270, %v268, 0
        %v275 = vsel %vm270, %v269, 0
        %277 = vmatprep.subr.mxu0 0.0
        %278 = vmatpush1.msra.mxu0 %v250
        %279 = vmatprep.subr.mxu0 0.0
        %280 = vmatpush1.msra.mxu0 %v259
        %281 = vmatprep.subr.mxu0 0.0
        %282 = vmatpush1.msra.mxu0 %v266
        %283 = vmatprep.subr.mxu0 0.0
        %284 = vmatpush1.msra.mxu0 0.0
        %285 = vmatprep.subr.mxu0 0.0
        %286 = vmatpush1.msra.mxu0 0.0
        %287 = vmatprep.subr.mxu0 0.0
        %288 = vmatpush1.msra.mxu0 0.0
        %289 = vmatprep.subr.mxu0 0.0
        %290 = vmatpush1.msra.mxu0 0.0
        %291 = vmatprep.subr.mxu0 0.0
        %292 = vmatpush1.msra.mxu0 0.0
        %293 = vmatprep.subr.mxu0 0.0
        %294 = vmatpush1.msra.mxu0 0.0
        %295 = vmatprep.subr.mxu0 0.0
        %296 = vmatpush1.msra.mxu0 0.0
        %297 = vmatprep.subr.mxu0 0.0
        %298 = vmatpush1.msra.mxu0 0.0
        %299 = vmatprep.subr.mxu0 0.0
        %300 = vmatpush1.msra.mxu0 0.0
        %301 = vmatprep.subr.mxu0 0.0
        %302 = vmatpush1.msra.mxu0 0.0
        %303 = vmatprep.subr.mxu0 0.0
        %304 = vmatpush1.msra.mxu0 0.0
        %305 = vmatprep.subr.mxu0 0.0
        %306 = vmatpush1.msra.mxu0 0.0
        %307 = vmatprep.subr.mxu0 0.0
        %308 = vmatpush1.msra.mxu0 0.0
        %309 = vmatprep.subr.mxu0 0.0
        %310 = vmatpush1.msra.mxu0 0.0
        %311 = vmatprep.subr.mxu0 0.0
        %312 = vmatpush1.msra.mxu0 0.0
        %313 = vmatprep.subr.mxu0 0.0
        %314 = vmatpush1.msra.mxu0 0.0
        %315 = vmatprep.subr.mxu0 0.0
        %316 = vmatpush1.msra.mxu0 0.0
        %317 = vmatprep.subr.mxu0 0.0
        %318 = vmatpush1.msra.mxu0 0.0
        %319 = vmatprep.subr.mxu0 0.0
        %320 = vmatpush1.msra.mxu0 0.0
        %321 = vmatprep.subr.mxu0 0.0
        %322 = vmatpush1.msra.mxu0 0.0
        %323 = vmatprep.subr.mxu0 0.0
        %324 = vmatpush1.msra.mxu0 0.0
        %325 = vmatprep.subr.mxu0 0.0
        %326 = vmatpush1.msra.mxu0 0.0
        %327 = vmatprep.subr.mxu0 0.0
        %328 = vmatpush1.msra.mxu0 0.0
        %329 = vmatprep.subr.mxu0 0.0
        %330 = vmatpush1.msra.mxu0 0.0
        %331 = vmatprep.subr.mxu0 0.0
        %332 = vmatpush1.msra.mxu0 0.0
        %333 = vmatprep.subr.mxu0 0.0
        %334 = vmatpush1.msra.mxu0 0.0
        %335 = vmatprep.subr.mxu0 0.0
        %336 = vmatpush1.msra.mxu0 0.0
        %337 = vmatprep.subr.mxu0 0.0
        %338 = vmatpush1.msra.mxu0 0.0
        %339 = vmatprep.subr.mxu0 0.0
        %340 = vmatpush1.msra.mxu0 0.0
        %341 = vmatprep.mubr.f32.mxu0 0.0
        %342 = vmatmul.mubr.f32.gmra.mrb[0].mxu0 %v272
        %v343 = vpop.f32.mrb[0].mxu0
        %v344 = vadd.f32 0.0, %v343
        %v345 = vpop.f32.mrb[0].mxu0
        %346 = vmatprep.mubr.f32.mxu0 0.0
        %347 = vmatmul.mubr.f32.gmra.mrb[0].mxu0 %v275
        %v348 = vpop.f32.mrb[0].mxu0
        %v349 = vadd.f32 0.0, %v348
        %v350 = vpop.f32.mrb[0].mxu0
        %351 = vdwg.mxu0
        %v352 = vld [vmem:[%s5] sm:$0xff]
        %v353 = vld [vmem:[%s5 + $0x8] sm:$0xff]
        %v354 = vld [vmem:[%s5 + $0x10] sm:$0xff]
        %v355 = vld [vmem:[%s5 + $0x18] sm:$0xff]
        %v356 = vld [vmem:[%s5 + $0x20] sm:$0xff]
        %v357 = vld [vmem:[%s5 + $0x28] sm:$0xff]
        %v358 = vld [vmem:[%s5 + $0x30] sm:$0xff]
        %v359 = vld [vmem:[%s5 + $0x38] sm:$0xff]
        %v360 = vld [vmem:[%s5 + $0x40] sm:$0xff]
        %v361 = vld [vmem:[%s5 + $0x48] sm:$0xff]
        %v362 = vld [vmem:[%s5 + $0x50] sm:$0xff]
        %v363 = vld [vmem:[%s5 + $0x58] sm:$0xff]
        %v364 = vld [vmem:[%s5 + $0x60] sm:$0xff]
        %v365 = vld [vmem:[%s5 + $0x68] sm:$0xff]
        %v366 = vld [vmem:[%s5 + $0x70] sm:$0xff]
        %v367 = vld [vmem:[%s5 + $0x78] sm:$0xff]
        %368 = vmatprep.subr.mxu0 0.0
        %369 = vmatpush1.msra.mxu0 %v352
        %370 = vmatprep.subr.mxu0 0.0
        %371 = vmatpush1.msra.mxu0 %v353
        %372 = vmatprep.subr.mxu0 0.0
        %373 = vmatpush1.msra.mxu0 %v354
        %374 = vmatprep.subr.mxu0 0.0
        %375 = vmatpush1.msra.mxu0 %v355
        %376 = vmatprep.subr.mxu0 0.0
        %377 = vmatpush1.msra.mxu0 %v356
        %378 = vmatprep.subr.mxu0 0.0
        %379 = vmatpush1.msra.mxu0 %v357
        %380 = vmatprep.subr.mxu0 0.0
        %381 = vmatpush1.msra.mxu0 %v358
        %382 = vmatprep.subr.mxu0 0.0
        %383 = vmatpush1.msra.mxu0 %v359
        %384 = vmatprep.subr.mxu0 0.0
        %385 = vmatpush1.msra.mxu0 %v360
        %386 = vmatprep.subr.mxu0 0.0
        %387 = vmatpush1.msra.mxu0 %v361
        %388 = vmatprep.subr.mxu0 0.0
        %389 = vmatpush1.msra.mxu0 %v362
        %390 = vmatprep.subr.mxu0 0.0
        %391 = vmatpush1.msra.mxu0 %v363
        %392 = vmatprep.subr.mxu0 0.0
        %393 = vmatpush1.msra.mxu0 %v364
        %394 = vmatprep.subr.mxu0 0.0
        %395 = vmatpush1.msra.mxu0 %v365
        %396 = vmatprep.subr.mxu0 0.0
        %397 = vmatpush1.msra.mxu0 %v366
        %398 = vmatprep.subr.mxu0 0.0
        %399 = vmatpush1.msra.mxu0 %v367
        %400 = vmatprep.subr.mxu0 0.0
        %401 = vmatpush1.msra.mxu0 0.0
        %402 = vmatprep.subr.mxu0 0.0
        %403 = vmatpush1.msra.mxu0 0.0
        %404 = vmatprep.subr.mxu0 0.0
        %405 = vmatpush1.msra.mxu0 0.0
        %406 = vmatprep.subr.mxu0 0.0
        %407 = vmatpush1.msra.mxu0 0.0
        %408 = vmatprep.subr.mxu0 0.0
        %409 = vmatpush1.msra.mxu0 0.0
        %410 = vmatprep.subr.mxu0 0.0
        %411 = vmatpush1.msra.mxu0 0.0
        %412 = vmatprep.subr.mxu0 0.0
        %413 = vmatpush1.msra.mxu0 0.0
        %414 = vmatprep.subr.mxu0 0.0
        %415 = vmatpush1.msra.mxu0 0.0
        %416 = vmatprep.subr.mxu0 0.0
        %417 = vmatpush1.msra.mxu0 0.0
        %418 = vmatprep.subr.mxu0 0.0
        %419 = vmatpush1.msra.mxu0 0.0
        %420 = vmatprep.subr.mxu0 0.0
        %421 = vmatpush1.msra.mxu0 0.0
        %422 = vmatprep.subr.mxu0 0.0
        %423 = vmatpush1.msra.mxu0 0.0
        %424 = vmatprep.subr.mxu0 0.0
        %425 = vmatpush1.msra.mxu0 0.0
        %426 = vmatprep.subr.mxu0 0.0
        %427 = vmatpush1.msra.mxu0 0.0
        %428 = vmatprep.subr.mxu0 0.0
        %429 = vmatpush1.msra.mxu0 0.0
        %430 = vmatprep.subr.mxu0 0.0
        %431 = vmatpush1.msra.mxu0 0.0
        %432 = vmatprep.mubr.f32.mxu0 0.0
        %433 = vmatmul.mubr.f32.gmra.mrb[0].mxu0 %v344
        %v434 = vpop.f32.mrb[0].mxu0
        %v435 = vadd.f32 0.0, %v434
        %v436 = vpop.f32.mrb[0].mxu0
        %437 = vmatprep.mubr.f32.mxu0 0.0
        %438 = vmatmul.mubr.f32.gmra.mrb[0].mxu0 %v349
        %v439 = vpop.f32.mrb[0].mxu0
        %v440 = vadd.f32 0.0, %v439
        %v441 = vpop.f32.mrb[0].mxu0
        %442 = vdwg.mxu0
        %v443 = vmul.f32 %v344, %v344
        %v444 = vmul.f32 %v349, %v349
        %445 = vmatprep.subr.mxu0 0.0
        %446 = vmatpush1.msra.mxu0 %v352
        %447 = vmatprep.subr.mxu0 0.0
        %448 = vmatpush1.msra.mxu0 %v353
        %449 = vmatprep.subr.mxu0 0.0
        %450 = vmatpush1.msra.mxu0 %v354
        %451 = vmatprep.subr.mxu0 0.0
        %452 = vmatpush1.msra.mxu0 %v355
        %453 = vmatprep.subr.mxu0 0.0
        %454 = vmatpush1.msra.mxu0 %v356
        %455 = vmatprep.subr.mxu0 0.0
        %456 = vmatpush1.msra.mxu0 %v357
        %457 = vmatprep.subr.mxu0 0.0
        %458 = vmatpush1.msra.mxu0 %v358
        %459 = vmatprep.subr.mxu0 0.0
        %460 = vmatpush1.msra.mxu0 %v359
        %461 = vmatprep.subr.mxu0 0.0
        %462 = vmatpush1.msra.mxu0 %v360
        %463 = vmatprep.subr.mxu0 0.0
        %464 = vmatpush1.msra.mxu0 %v361
        %465 = vmatprep.subr.mxu0 0.0
        %466 = vmatpush1.msra.mxu0 %v362
        %467 = vmatprep.subr.mxu0 0.0
        %468 = vmatpush1.msra.mxu0 %v363
        %469 = vmatprep.subr.mxu0 0.0
        %470 = vmatpush1.msra.mxu0 %v364
        %471 = vmatprep.subr.mxu0 0.0
        %472 = vmatpush1.msra.mxu0 %v365
        %473 = vmatprep.subr.mxu0 0.0
        %474 = vmatpush1.msra.mxu0 %v366
        %475 = vmatprep.subr.mxu0 0.0
        %476 = vmatpush1.msra.mxu0 %v367
        %477 = vmatprep.subr.mxu0 0.0
        %478 = vmatpush1.msra.mxu0 0.0
        %479 = vmatprep.subr.mxu0 0.0
        %480 = vmatpush1.msra.mxu0 0.0
        %481 = vmatprep.subr.mxu0 0.0
        %482 = vmatpush1.msra.mxu0 0.0
        %483 = vmatprep.subr.mxu0 0.0
        %484 = vmatpush1.msra.mxu0 0.0
        %485 = vmatprep.subr.mxu0 0.0
        %486 = vmatpush1.msra.mxu0 0.0
        %487 = vmatprep.subr.mxu0 0.0
        %488 = vmatpush1.msra.mxu0 0.0
        %489 = vmatprep.subr.mxu0 0.0
        %490 = vmatpush1.msra.mxu0 0.0
        %491 = vmatprep.subr.mxu0 0.0
        %492 = vmatpush1.msra.mxu0 0.0
        %493 = vmatprep.subr.mxu0 0.0
        %494 = vmatpush1.msra.mxu0 0.0
        %495 = vmatprep.subr.mxu0 0.0
        %496 = vmatpush1.msra.mxu0 0.0
        %497 = vmatprep.subr.mxu0 0.0
        %498 = vmatpush1.msra.mxu0 0.0
        %499 = vmatprep.subr.mxu0 0.0
        %500 = vmatpush1.msra.mxu0 0.0
        %501 = vmatprep.subr.mxu0 0.0
        %502 = vmatpush1.msra.mxu0 0.0
        %503 = vmatprep.subr.mxu0 0.0
        %504 = vmatpush1.msra.mxu0 0.0
        %505 = vmatprep.subr.mxu0 0.0
        %506 = vmatpush1.msra.mxu0 0.0
        %507 = vmatprep.subr.mxu0 0.0
        %508 = vmatpush1.msra.mxu0 0.0
        %509 = vmatprep.mubr.f32.mxu0 0.0
        %510 = vmatmul.mubr.f32.gmra.mrb[0].mxu0 %v443
        %v511 = vpop.f32.mrb[0].mxu0
        %v512 = vadd.f32 0.0, %v511
        %v513 = vpop.f32.mrb[0].mxu0
        %514 = vmatprep.mubr.f32.mxu0 0.0
        %515 = vmatmul.mubr.f32.gmra.mrb[0].mxu0 %v444
        %v516 = vpop.f32.mrb[0].mxu0
        %v517 = vadd.f32 0.0, %v516
        %v518 = vpop.f32.mrb[0].mxu0
        %519 = vdwg.mxu0
        %522 = vrot.lane.b32.xlu0 %v512, 1
        %v523 = vpop.permute.xlu0 %522
        %524 = vrot.lane.b32.xlu0 %v517, 1
        %v525 = vpop.permute.xlu0 %524
        %vm528 = vcmask 7168
        %v529 = vsel %vm528, %v435, %v523
        %v530 = vsel %vm528, %v440, %v525
        %v531 = vld [vmem:[%s4] sm:$0xff]
        %v532 = vld [vmem:[%s4 + $0x8] sm:$0xff]
        %v533 = vld [vmem:[%s3] sm:$0xff]
        %vm534 = vcmask 130048
        %v536 = vsel %vm534, %v533, 0
        %538 = vmatprep.subr.mxu0 0.0
        %539 = vmatpush1.msra.mxu0 %v529
        %540 = vmatprep.subr.mxu0 0.0
        %541 = vmatpush1.msra.mxu0 %v530
        %542 = vmatprep.subr.mxu0 0.0
        %543 = vmatpush1.msra.mxu0 0.0
        %544 = vmatprep.subr.mxu0 0.0
        %545 = vmatpush1.msra.mxu0 0.0
        %546 = vmatprep.subr.mxu0 0.0
        %547 = vmatpush1.msra.mxu0 0.0
        %548 = vmatprep.subr.mxu0 0.0
        %549 = vmatpush1.msra.mxu0 0.0
        %550 = vmatprep.subr.mxu0 0.0
        %551 = vmatpush1.msra.mxu0 0.0
        %552 = vmatprep.subr.mxu0 0.0
        %553 = vmatpush1.msra.mxu0 0.0
        %554 = vmatprep.subr.mxu0 0.0
        %555 = vmatpush1.msra.mxu0 0.0
        %556 = vmatprep.subr.mxu0 0.0
        %557 = vmatpush1.msra.mxu0 0.0
        %558 = vmatprep.subr.mxu0 0.0
        %559 = vmatpush1.msra.mxu0 0.0
        %560 = vmatprep.subr.mxu0 0.0
        %561 = vmatpush1.msra.mxu0 0.0
        %562 = vmatprep.subr.mxu0 0.0
        %563 = vmatpush1.msra.mxu0 0.0
        %564 = vmatprep.subr.mxu0 0.0
        %565 = vmatpush1.msra.mxu0 0.0
        %566 = vmatprep.subr.mxu0 0.0
        %567 = vmatpush1.msra.mxu0 0.0
        %568 = vmatprep.subr.mxu0 0.0
        %569 = vmatpush1.msra.mxu0 0.0
        %570 = vmatprep.subr.mxu0 0.0
        %571 = vmatpush1.msra.mxu0 0.0
        %572 = vmatprep.subr.mxu0 0.0
        %573 = vmatpush1.msra.mxu0 0.0
        %574 = vmatprep.subr.mxu0 0.0
        %575 = vmatpush1.msra.mxu0 0.0
        %576 = vmatprep.subr.mxu0 0.0
        %577 = vmatpush1.msra.mxu0 0.0
        %578 = vmatprep.subr.mxu0 0.0
        %579 = vmatpush1.msra.mxu0 0.0
        %580 = vmatprep.subr.mxu0 0.0
        %581 = vmatpush1.msra.mxu0 0.0
        %582 = vmatprep.subr.mxu0 0.0
        %583 = vmatpush1.msra.mxu0 0.0
        %584 = vmatprep.subr.mxu0 0.0
        %585 = vmatpush1.msra.mxu0 0.0
        %586 = vmatprep.subr.mxu0 0.0
        %587 = vmatpush1.msra.mxu0 0.0
        %588 = vmatprep.subr.mxu0 0.0
        %589 = vmatpush1.msra.mxu0 0.0
        %590 = vmatprep.subr.mxu0 0.0
        %591 = vmatpush1.msra.mxu0 0.0
        %592 = vmatprep.subr.mxu0 0.0
        %593 = vmatpush1.msra.mxu0 0.0
        %594 = vmatprep.subr.mxu0 0.0
        %595 = vmatpush1.msra.mxu0 0.0
        %596 = vmatprep.subr.mxu0 0.0
        %597 = vmatpush1.msra.mxu0 0.0
        %598 = vmatprep.subr.mxu0 0.0
        %599 = vmatpush1.msra.mxu0 0.0
        %600 = vmatprep.subr.mxu0 0.0
        %601 = vmatpush1.msra.mxu0 0.0
        %602 = vmatprep.mubr.f32.mxu0 0.0
        %603 = vmatmul.mubr.f32.gmra.mrb[0].mxu0 %v536
        %v604 = vpop.f32.mrb[0].mxu0
        %v605 = vadd.f32 0.0, %v604
        %v606 = vpop.f32.mrb[0].mxu0
        %607 = vdwg.mxu0
        %vm608 = vcmask 64512
        %v610 = vsel %vm608, %v531, 0
        %v613 = vsel %vm608, %v532, 0
        %615 = vmatprep.subr.mxu0 0.0
        %616 = vmatpush1.msra.mxu0 %v605
        %617 = vmatprep.subr.mxu0 0.0
        %618 = vmatpush1.msra.mxu0 0.0
        %619 = vmatprep.subr.mxu0 0.0
        %620 = vmatpush1.msra.mxu0 0.0
        %621 = vmatprep.subr.mxu0 0.0
        %622 = vmatpush1.msra.mxu0 0.0
        %623 = vmatprep.subr.mxu0 0.0
        %624 = vmatpush1.msra.mxu0 0.0
        %625 = vmatprep.subr.mxu0 0.0
        %626 = vmatpush1.msra.mxu0 0.0
        %627 = vmatprep.subr.mxu0 0.0
        %628 = vmatpush1.msra.mxu0 0.0
        %629 = vmatprep.subr.mxu0 0.0
        %630 = vmatpush1.msra.mxu0 0.0
        %631 = vmatprep.subr.mxu0 0.0
        %632 = vmatpush1.msra.mxu0 0.0
        %633 = vmatprep.subr.mxu0 0.0
        %634 = vmatpush1.msra.mxu0 0.0
        %635 = vmatprep.subr.mxu0 0.0
        %636 = vmatpush1.msra.mxu0 0.0
        %637 = vmatprep.subr.mxu0 0.0
        %638 = vmatpush1.msra.mxu0 0.0
        %639 = vmatprep.subr.mxu0 0.0
        %640 = vmatpush1.msra.mxu0 0.0
        %641 = vmatprep.subr.mxu0 0.0
        %642 = vmatpush1.msra.mxu0 0.0
        %643 = vmatprep.subr.mxu0 0.0
        %644 = vmatpush1.msra.mxu0 0.0
        %645 = vmatprep.subr.mxu0 0.0
        %646 = vmatpush1.msra.mxu0 0.0
        %647 = vmatprep.subr.mxu0 0.0
        %648 = vmatpush1.msra.mxu0 0.0
        %649 = vmatprep.subr.mxu0 0.0
        %650 = vmatpush1.msra.mxu0 0.0
        %651 = vmatprep.subr.mxu0 0.0
        %652 = vmatpush1.msra.mxu0 0.0
        %653 = vmatprep.subr.mxu0 0.0
        %654 = vmatpush1.msra.mxu0 0.0
        %655 = vmatprep.subr.mxu0 0.0
        %656 = vmatpush1.msra.mxu0 0.0
        %657 = vmatprep.subr.mxu0 0.0
        %658 = vmatpush1.msra.mxu0 0.0
        %659 = vmatprep.subr.mxu0 0.0
        %660 = vmatpush1.msra.mxu0 0.0
        %661 = vmatprep.subr.mxu0 0.0
        %662 = vmatpush1.msra.mxu0 0.0
        %663 = vmatprep.subr.mxu0 0.0
        %664 = vmatpush1.msra.mxu0 0.0
        %665 = vmatprep.subr.mxu0 0.0
        %666 = vmatpush1.msra.mxu0 0.0
        %667 = vmatprep.subr.mxu0 0.0
        %668 = vmatpush1.msra.mxu0 0.0
        %669 = vmatprep.subr.mxu0 0.0
        %670 = vmatpush1.msra.mxu0 0.0
        %671 = vmatprep.subr.mxu0 0.0
        %672 = vmatpush1.msra.mxu0 0.0
        %673 = vmatprep.subr.mxu0 0.0
        %674 = vmatpush1.msra.mxu0 0.0
        %675 = vmatprep.subr.mxu0 0.0
        %676 = vmatpush1.msra.mxu0 0.0
        %677 = vmatprep.subr.mxu0 0.0
        %678 = vmatpush1.msra.mxu0 0.0
        %679 = vmatprep.mubr.f32.mxu0 0.0
        %680 = vmatmul.mubr.f32.gmra.mrb[0].mxu0 %v610
        %v681 = vpop.f32.mrb[0].mxu0
        %v682 = vadd.f32 0.0, %v681
        %v683 = vpop.f32.mrb[0].mxu0
        %684 = vmatprep.mubr.f32.mxu0 0.0
        %685 = vmatmul.mubr.f32.gmra.mrb[0].mxu0 %v613
        %v686 = vpop.f32.mrb[0].mxu0
        %v687 = vadd.f32 0.0, %v686
        %v688 = vpop.f32.mrb[0].mxu0
        %689 = vdwg.mxu0
        %v690 = vmul.f32 %v682, %v682
        %v691 = vmul.f32 %v687, %v687
        %694 = vrot.lane.b32.xlu0 %v690, 1
        %v695 = vpop.permute.xlu0 %694
        %696 = vrot.lane.b32.xlu0 %v691, 1
        %v697 = vpop.permute.xlu0 %696
        %v700 = vsub.f32 %v682, %v695
        %v701 = vsub.f32 %v687, %v697
        %v702 = vmax.f32 %v700, 0.0
        %v703 = vmax.f32 %v701, 0.0
        %v704 = vadd.f32 %v702, 1e-05
        %v705 = vadd.f32 %v703, 1e-05
        %v706 = vrsqrt.pop %v704
        %v707 = vrsqrt.pop %v705
        %v708 = vld [vmem:[%s2] sm:$0xff]
        %v709 = vld [vmem:[%s2 + $0x8] sm:$0xff]
        %712 = vrot.lane.b32.xlu0 %v708, 1
        %v713 = vpop.permute.xlu0 %712
        %714 = vrot.lane.b32.xlu0 %v709, 1
        %v715 = vpop.permute.xlu0 %714
        %v718 = vmul.f32 %v706, %v713
        %v719 = vmul.f32 %v707, %v715
        %722 = vrot.lane.b32.xlu0 %v718, 127
        %v723 = vpop.permute.xlu0 %722
        %724 = vrot.lane.b32.xlu0 %v719, 127
        %v725 = vpop.permute.xlu0 %724
        %v728 = vmul.f32 %v682, %v723
        %v729 = vmul.f32 %v687, %v725
        %732 = vrot.lane.b32.xlu0 %v728, 1
        %v733 = vpop.permute.xlu0 %732
        %734 = vrot.lane.b32.xlu0 %v729, 1
        %v735 = vpop.permute.xlu0 %734
        %v738 = vsub.f32 %v708, %v733
        %v739 = vsub.f32 %v709, %v735
        %740 = vset.pattern.permute.xlu0 1
        %741 = vperm.xlu0 %740, %v718
        %v742 = vpop.permute.xlu0 %741
        %744 = vset.pattern.permute.xlu0 1
        %745 = vperm.xlu0 %744, %v719
        %v746 = vpop.permute.xlu0 %745
        %v748 = vmul.f32 %v344, %v742
        %v749 = vmul.f32 %v349, %v746
        %751 = vset.pattern.permute.xlu0 1
        %752 = vperm.xlu0 %751, %v738
        %v753 = vpop.permute.xlu0 %752
        %756 = vset.pattern.permute.xlu0 1
        %757 = vperm.xlu0 %756, %v739
        %v758 = vpop.permute.xlu0 %757
        %v760 = vadd.f32 %v748, %v753
        %v761 = vadd.f32 %v749, %v758
        %v762 = vmax.f32 %v760, 0.0
        %v763 = vmax.f32 %v761, 0.0
        %v764 = vand.u32 2147483647, %v760
        %v765 = vand.u32 2147483647, %v761
        %v766 = vsub.f32 0.0, %v764
        %v767 = vsub.f32 0.0, %v765
        %v768 = vmul.f32 %v766, 1.442695
        %v769 = vpow.pop %v768
        %v770 = vmul.f32 %v767, 1.442695
        %v771 = vpow.pop %v770
        %v772 = vadd.f32 %v769, 1.0
        %v773 = vadd.f32 %v771, 1.0
        %v774 = vlog2.pop %v772
        %v775 = vmul.f32 %v774, 0.6931472
        %v776 = vlog2.pop %v773
        %v777 = vmul.f32 %v776, 0.6931472
        %v778 = vadd.f32 %v762, %v775
        %v779 = vadd.f32 %v763, %v777
        %v780 = vtanh.pop %v778
        %v781 = vtanh.pop %v779
        %v782 = vmul.f32 %v760, %v780
        %v783 = vmul.f32 %v761, %v781
        %784 = vst [vmem:[%s244] sm:$0xff] %v782
        %785 = vst [vmem:[%s244 + $0x8] sm:$0xff] %v783
        %s786 = sand.u32 %s159, 1
        %s787 = scalar_lea.sflag [#allocation3], %s786
        %s788 = sand.u32 %s159, 1
        %s789 = smul.addr %s788, 16
        %s790 = scalar_lea.vmem [#allocation2], %s789
        // Predicated region
        $region45: #{conv1d_block.1} parent=43 // pred_check
          %p791 = pneg %p169
        $region46: #{conv1d_block.1} parent=43 // pred_check_branch
          %793 = sbr.rel (%p791) target = $region48
        $region47: #{conv1d_block.1} parent=43 // pred_region
          %s795 = ssub.s32 256, 256
          %796 = vsyncadd %s787, %s795
          %s797 = smul.addr %s20, 2
          %s798 = smul.addr %s797, 128
          %s799 = scalar_lea.hbm %s6, %s798
          %s800 = sshll.u32 %s790, 4
          %s801 = int_to_ptr.vmem [resolvable:$true] %s800
          %806 = dma.vmem_to_hbm [thread:$0]  %s801, 256, %s799, %s787, 128, 128, 8
        $region48: #{conv1d_block.1} parent=43 // pred_fallthru
          _
      $region44: #{conv1d_block.1} parent=5 // pred_fallthru
        _
      %p807 = scmp.le.s32.totalorder 2, %s15
      // Predicated region
      $region49: #{conv1d_block.1} parent=5 // pred_check
        %p808 = pneg %p807
      $region50: #{conv1d_block.1} parent=5 // pred_check_branch
        %810 = sbr.rel (%p808) target = $region52
      $region51: #{conv1d_block.1} parent=5 // pred_region
        %s811 = ssub.s32 %s15, 2
        // Predicated region
        $region53: #{conv1d_block.1} parent=51 // pred_check
          %p812 = pneg %p175
        $region54: #{conv1d_block.1} parent=51 // pred_check_branch
          %814 = sbr.rel (%p812) target = $region56
        $region55: #{conv1d_block.1} parent=51 // pred_region
          %s815 = sand.u32 %s160, 1
          %s816 = scalar_lea.sflag [#allocation3], %s815
          %s817 = sand.u32 %s160, 1
          %s818 = smul.addr %s817, 16
          %s819 = scalar_lea.vmem [#allocation2], %s818
          %820 = dma.done %s816, 256
        $region56: #{conv1d_block.1} parent=51 // pred_fallthru
          _
      $region52: #{conv1d_block.1} parent=5 // pred_fallthru
        _
    $region6: #{conv1d_block.1} parent=1 // loop_footer
      %s19 = sadd.s32 1, %s15
    $region7: #{conv1d_block.1} parent=1 // loop_footer_branch
      %14 = sbr.rel target = $region3
    $region8: #{conv1d_block.1} parent=1 // loop_exit
      _
    %821 = vsyncpa [#allocation3], 1
    %s822 = scalar_lea.sflag [#allocation3], 1
    %823 = vsyncpa %s822, 1

</llo_original>
